<compile_context>
chip_gen: v7x
topology: tpu7x:2x2x1
jax: 0.10.0
libtpu: 0.0.40
codegen_flags: <defaults>
</compile_context>

<pallas_src>
import functools

import jax
import jax.numpy as jnp
from jax.experimental import pallas as pl
from jax.experimental.pallas import tpu as pltpu


def _round_up(x: int, m: int) -> int:
    return (x + m - 1) // m * m


def _patch_embed_kernel(patches_ref, w_ref, b_ref, out_ref):
    # patches_ref: (tm, K)   compute dtype (bf16 by default)
    # w_ref:       (K,  te)  compute dtype, resident across the M grid axis
    # b_ref:       (1,  te)  f32
    # out_ref:     (tm, te)  out dtype (f32 by default, optionally bf16)
    acc = jnp.dot(patches_ref[...], w_ref[...],
                  preferred_element_type=jnp.float32)
    out_ref[...] = (acc + b_ref[...]).astype(out_ref.dtype)


def patch_embedding_forward(x, weight, bias, *, patch_size, tile_m=1024,
                            compute_dtype=jnp.bfloat16, out_dtype=None,
                            vmem_limit_bytes=None):
    """ViT PatchEmbedding forward: (B, C, H, W) -> (B, N, E).

    Matches torch: Conv2d(kernel=stride=patch_size) -> flatten(2) -> permute(0,2,1).
    """
    B, C, H, W = x.shape
    E = weight.shape[0]
    P = patch_size
    assert H % P == 0 and W % P == 0, "image size must be divisible by patch_size"
    Hp, Wp = H // P, W // P
    N = Hp * Wp
    K = C * P * P
    M = B * N
    out_dtype = x.dtype if out_dtype is None else out_dtype

    # --- im2col (wrapper side) ------------------------------------------
    # Cast FIRST: if XLA does not fuse the transpose into the pallas DMA, the
    # materialized intermediate is compute-dtype sized (half of f32).
    xc = x.astype(compute_dtype)
    patches = xc.reshape(B, C, Hp, P, Wp, P)
    patches = jnp.transpose(patches, (0, 2, 4, 1, 3, 5)).reshape(M, K)

    # Conv2d weight (E, C, P, P) -> matmul weight (K, E); bias -> (1, E) f32.
    w_mat = weight.reshape(E, K).T.astype(compute_dtype)
    b_mat = bias.reshape(1, E).astype(jnp.float32)

    # --- tiling ------------------------------------------------------------
    tile_m = max(128, _round_up(int(tile_m), 128))
    if M > 128:
        # At least two M steps: keeps the input/output pipeline busy and lets
        # v7x's two TensorCores split the (parallel) M axis.
        tm = min(tile_m, max(128, _round_up(pl.cdiv(M, 2), 128)))
    else:
        tm = M                          # tiny M: single full block
    grid_m = pl.cdiv(M, tm)

    # Small-M inference: whole problem fits one M tile -> split E into
    # 128-aligned column blocks instead so there are still >=2 parallel steps.
    if grid_m == 1 and E >= 256:
        te = _round_up(pl.cdiv(E, 2), 128)
    else:
        te = E
    grid_e = pl.cdiv(E, te)

    c_item = jnp.dtype(compute_dtype).itemsize
    o_item = jnp.dtype(out_dtype).itemsize
    cost = pl.CostEstimate(
        flops=2 * M * K * E,
        transcendentals=0,
        bytes_accessed=M * K * c_item + K * E * c_item + E * 4 + M * E * o_item,
    )

    out = pl.pallas_call(
        _patch_embed_kernel,
        out_shape=jax.ShapeDtypeStruct((M, E), out_dtype),
        grid=(grid_m, grid_e),
        in_specs=[
            pl.BlockSpec((tm, K), lambda i, j: (i, 0)),   # patches: streamed over M
            pl.BlockSpec((K, te), lambda i, j: (0, j)),   # weight: resident
            pl.BlockSpec((1, te), lambda i, j: (0, j)),   # bias: resident
        ],
        out_specs=pl.BlockSpec((tm, te), lambda i, j: (i, j)),
        compiler_params=pltpu.CompilerParams(
            dimension_semantics=("parallel", "parallel"),
            # Let XLA fuse the im2col transpose/cast into operand 0's DMA.
            allow_input_fusion=[True, False, False],
            vmem_limit_bytes=vmem_limit_bytes,
        ),
        cost_estimate=cost,
    )(patches, w_mat, b_mat)

    return out.reshape(B, N, E)


def _reference(x, weight, bias, patch_size):
    """Pure-JAX reference of the same conv-as-matmul math."""
    B, C, H, W = x.shape
    E = weight.shape[0]
    P = patch_size
    Hp, Wp = H // P, W // P
    p = jnp.transpose(x.reshape(B, C, Hp, P, Wp, P), (0, 2, 4, 1, 3, 5))
    p = p.reshape(B * Hp * Wp, C * P * P)
    out = jnp.dot(p, weight.reshape(E, -1).T,
                  precision=jax.lax.Precision.HIGHEST) + bias
    return out.reshape(B, Hp * Wp, E)


if __name__ == "__main__":
    # Small shapes consistent with the module:
    #   batch=2, in_channels=4, image 16x16, patch_size=4, embedding_dim=32.
    B, C, H, W, P, E = 2, 4, 16, 16, 4, 32
    kx, kw, kb = jax.random.split(jax.random.PRNGKey(0), 3)
    x = jax.random.normal(kx, (B, C, H, W), dtype=jnp.float32)
    weight = jax.random.normal(kw, (E, C, P, P), dtype=jnp.float32) * 0.02
    bias = jax.random.normal(kb, (E,), dtype=jnp.float32) * 0.02

    ref = _reference(x, weight, bias, P)

    # Default path: bf16 MXU inputs, f32 accumulation, f32 output.
    fwd = jax.jit(functools.partial(patch_embedding_forward, patch_size=P))
    out = jax.block_until_ready(fwd(x, weight, bias))
    assert out.shape == (B, (H // P) * (W // P), E)
    assert jnp.allclose(out, ref, atol=1e-2, rtol=1e-2)

    # f32-compute escape hatch (parity knob) -- same loose tolerance to stay
    # independent of the backend's internal matmul pass decomposition.
    fwd32 = jax.jit(functools.partial(patch_embedding_forward, patch_size=P,
                                      compute_dtype=jnp.float32))
    out32 = jax.block_until_ready(fwd32(x, weight, bias))
    assert jnp.allclose(out32, ref, atol=1e-2, rtol=1e-2)

    # Slightly larger case exercising a multi-step M grid with a partial
    # (masked, dropped) last tile: M = 2*18*18 = 648 rows, tm = 384 -> 2 steps.
    B2, C2, H2, W2, P2, E2 = 2, 3, 72, 72, 4, 32
    k2x, k2w, k2b = jax.random.split(jax.random.PRNGKey(0), 3)
    x2 = jax.random.normal(k2x, (B2, C2, H2, W2), dtype=jnp.float32)
    w2 = jax.random.normal(k2w, (E2, C2, P2, P2), dtype=jnp.float32) * 0.02
    b2 = jax.random.normal(k2b, (E2,), dtype=jnp.float32) * 0.02
    out2 = jax.block_until_ready(
        jax.jit(functools.partial(patch_embedding_forward, patch_size=P2))(x2, w2, b2))
    assert jnp.allclose(out2, _reference(x2, w2, b2, P2), atol=1e-2, rtol=1e-2)

    print("KERNEL_OK")
</pallas_src>

<mosaic_0001>
module attributes {stable_mosaic.version = 11 : i64} {
  func.func @_patch_embed_kernel(%arg0: i32, %arg1: i32, %arg2: memref<32x64xbf16, #tpu.memory_space<vmem>>, %arg3: memref<64x32xbf16, #tpu.memory_space<vmem>>, %arg4: memref<1x32xf32, #tpu.memory_space<vmem>>, %arg5: memref<32x32xf32, #tpu.memory_space<vmem>>) attributes {dimension_semantics = [#tpu.dimension_semantics<parallel>, #tpu.dimension_semantics<parallel>], iteration_bounds = array<i64: 1, 1>, scalar_prefetch = 0 : i64, scratch_operands = 0 : i64, tpu.core_type = #tpu.core_type<tc>, window_params = [{transform_indices = @transform_0, window_bounds = array<i64: 32, 64>}, {transform_indices = @transform_1, window_bounds = array<i64: 64, 32>}, {transform_indices = @transform_2, window_bounds = array<i64: 1, 32>}, {transform_indices = @transform_3, window_bounds = array<i64: 32, 32>}]} {
    %c0 = arith.constant 0 : index
    %c0_0 = arith.constant 0 : index
    %0 = vector.load %arg2[%c0, %c0_0] : memref<32x64xbf16, #tpu.memory_space<vmem>>, vector<32x64xbf16>
    %c0_1 = arith.constant 0 : index
    %c0_2 = arith.constant 0 : index
    %1 = vector.load %arg3[%c0_1, %c0_2] : memref<64x32xbf16, #tpu.memory_space<vmem>>, vector<64x32xbf16>
    %cst = arith.constant dense<0.000000e+00> : vector<32x32xf32>
    %2 = tpu.matmul %0, %1, %cst {dimension_numbers = #tpu.dot_dimension_numbers<[1], [0], [0], [1], [0, 0, 1, 1], [], []>} : vector<32x64xbf16>, vector<64x32xbf16>, vector<32x32xf32> -> vector<32x32xf32>
    %c0_3 = arith.constant 0 : index
    %c0_4 = arith.constant 0 : index
    %3 = vector.load %arg4[%c0_3, %c0_4] : memref<1x32xf32, #tpu.memory_space<vmem>>, vector<1x32xf32>
    %4 = vector.broadcast %3 : vector<1x32xf32> to vector<32x32xf32>
    %5 = arith.addf %2, %4 : vector<32x32xf32>
    %c0_5 = arith.constant 0 : index
    %c0_6 = arith.constant 0 : index
    %6 = vector.load %arg5[%c0_5, %c0_6] : memref<32x32xf32, #tpu.memory_space<vmem>>, vector<32x32xf32>
    tpu.vector_store %arg5[%c0_5, %c0_6], %5 {strides = array<i32>} : memref<32x32xf32, #tpu.memory_space<vmem>>, vector<32x32xf32>,
    return
  }
  func.func @transform_0(%arg0: i32, %arg1: i32) -> (i32, i32) {
    %c0_i32 = arith.constant 0 : i32
    %c0_i32_0 = arith.constant 0 : i32
    return %arg0, %c0_i32 : i32, i32
  }
  func.func @transform_1(%arg0: i32, %arg1: i32) -> (i32, i32) {
    %c0_i32 = arith.constant 0 : i32
    %c0_i32_0 = arith.constant 0 : i32
    return %c0_i32, %arg1 : i32, i32
  }
  func.func @transform_2(%arg0: i32, %arg1: i32) -> (i32, i32) {
    %c0_i32 = arith.constant 0 : i32
    %c0_i32_0 = arith.constant 0 : i32
    return %c0_i32, %arg1 : i32, i32
  }
  func.func @transform_3(%arg0: i32, %arg1: i32) -> (i32, i32) {
    %c0_i32 = arith.constant 0 : i32
    return %arg0, %arg1 : i32, i32
  }
}

</mosaic_0001>

<llo_original>
// kernel: patch_embedding_forward.1
$region0: #{patch_embedding_forward.1}
  #allocation0 [shape = 'u32[]', space=smem, size = 0x4, offset = 0x4, fixed_abs, tag = 'smem constant byte address 0x4 - core index']
  #allocation1 [shape = 'u32[144,128]{1,0:T(1,128)}', space=vmem, size = 0x12000, scoped, tag = 'internal scratch']
  %s0 = inlined_call_operand.vmem [shape: bf16[32,64], index: 0, kind: input, shape index: {}]
  %s1 = inlined_call_operand.vmem [shape: bf16[64,32], index: 1, kind: input, shape index: {}]
  %s2 = inlined_call_operand.vmem [shape: f32[1,32], index: 2, kind: input, shape index: {}]
  %s3 = inlined_call_operand.hbm [shape: f32[32,32], index: 3, kind: output, shape index: {}]
  %s4 = sld [smem:[#allocation0]]
  $region22: #{patch_embedding_forward.1} parent=0
    _
  %s6 = ssub.s32 1, %s4
  %s7 = scalar_select 0, %s6, %s4
  $region1: #{patch_embedding_forward.1} parent=0
    #allocation2 [shape = 'u8[16384]{0}', space=vmem, size = 0x4000, scoped, tag = 'output window, operand 0, single buffered']
    #allocation3 [shape = 's32[1]{0}', space=sflag, size = 0x4, scoped, tag = 'scoped memory for patch_embedding_forward.1']
    %8 = vsyncpa [#allocation3], 0
    // Predicated region
    $region2: #{patch_embedding_forward.1} parent=1 // pred_check
      _
    $region3: #{patch_embedding_forward.1} parent=1 // pred_check_branch
      %10 = sbr.rel (0) target = $region5
    $region4: #{patch_embedding_forward.1} parent=1 // pred_region
      _
    $region5: #{patch_embedding_forward.1} parent=1 // pred_fallthru
      _
    // Predicated region
    $region6: #{patch_embedding_forward.1} parent=1 // pred_check
      _
    $region7: #{patch_embedding_forward.1} parent=1 // pred_check_branch
      %12 = sbr.rel (0) target = $region9
    $region8: #{patch_embedding_forward.1} parent=1 // pred_region
      _
    $region9: #{patch_embedding_forward.1} parent=1 // pred_fallthru
      _
    // Predicated region
    $region10: #{patch_embedding_forward.1} parent=1 // pred_check
      _
    $region11: #{patch_embedding_forward.1} parent=1 // pred_check_branch
      %14 = sbr.rel (0) target = $region13
    $region12: #{patch_embedding_forward.1} parent=1 // pred_region
      _
    $region13: #{patch_embedding_forward.1} parent=1 // pred_fallthru
      _
    %v16 = vld [vmem:[%s0] sm:$0xf]
    %v17 = vld [vmem:[%s0 + $0x4] sm:$0xf]
    %v18 = vld [vmem:[%s0 + $0x8] sm:$0xf]
    %v19 = vld [vmem:[%s0 + $0xc] sm:$0xf]
    %v20 = vld [vmem:[%s1] sm:$0xf]
    %v21 = vld [vmem:[%s1 + $0x4] sm:$0xf]
    %v22 = vld [vmem:[%s1 + $0x8] sm:$0xf]
    %v23 = vld [vmem:[%s1 + $0xc] sm:$0xf]
    %v24 = vld [vmem:[%s1 + $0x10] sm:$0xf]
    %v25 = vld [vmem:[%s1 + $0x14] sm:$0xf]
    %v26 = vld [vmem:[%s1 + $0x18] sm:$0xf]
    %v27 = vld [vmem:[%s1 + $0x1c] sm:$0xf]
    %v28 = vld [vmem:[%s2] sm:$0x1]
    %v30 = vlaneseq
    %v31 = vshrl.u32 %v30, 7
    %v32 = vsub.s32 0, %v31
    %v33 = vrot.slane %v28, %v32
    %v39 = vunpack.c.l.b16 %v16
    %v40 = vunpack.c.l.b16 %v17
    %v41 = vunpack.c.l.b16 %v18
    %v42 = vunpack.c.l.b16 %v19
    %v43 = vpack.c.b16 %v40, %v39
    %v44 = vpack.c.b16 %v42, %v41
    %v53 = vunpack.c.l.b16 %v20
    %v54 = vunpack.c.l.b16 %v21
    %v55 = vunpack.c.l.b16 %v22
    %v56 = vunpack.c.l.b16 %v23
    %v57 = vunpack.c.l.b16 %v24
    %v58 = vunpack.c.l.b16 %v25
    %v59 = vunpack.c.l.b16 %v26
    %v60 = vunpack.c.l.b16 %v27
    %v61 = vpack.c.b16 %v54, %v53
    %v62 = vpack.c.b16 %v56, %v55
    %v63 = vpack.c.b16 %v58, %v57
    %v64 = vpack.c.b16 %v60, %v59
    %vm69 = vcmask 523264
    %v71 = vsel %vm69, %v43, 0
    %v74 = vsel %vm69, %v44, 0
    %76 = vmatprep.subr.bf16.mxu0 0
    %77 = vmatpush1.bf16.msra.mxu0 %v61
    %78 = vmatprep.subr.bf16.mxu0 0
    %79 = vmatpush1.bf16.msra.mxu0 %v62
    %80 = vmatprep.subr.bf16.mxu0 0
    %81 = vmatpush1.bf16.msra.mxu0 %v63
    %82 = vmatprep.subr.bf16.mxu0 0
    %83 = vmatpush1.bf16.msra.mxu0 %v64
    %84 = vmatprep.subr.bf16.mxu0 0
    %85 = vmatpush1.bf16.msra.mxu0 0
    %86 = vmatprep.subr.bf16.mxu0 0
    %87 = vmatpush1.bf16.msra.mxu0 0
    %88 = vmatprep.subr.bf16.mxu0 0
    %89 = vmatpush1.bf16.msra.mxu0 0
    %90 = vmatprep.subr.bf16.mxu0 0
    %91 = vmatpush1.bf16.msra.mxu0 0
    %92 = vmatprep.subr.bf16.mxu0 0
    %93 = vmatpush1.bf16.msra.mxu0 0
    %94 = vmatprep.subr.bf16.mxu0 0
    %95 = vmatpush1.bf16.msra.mxu0 0
    %96 = vmatprep.subr.bf16.mxu0 0
    %97 = vmatpush1.bf16.msra.mxu0 0
    %98 = vmatprep.subr.bf16.mxu0 0
    %99 = vmatpush1.bf16.msra.mxu0 0
    %100 = vmatprep.subr.bf16.mxu0 0
    %101 = vmatpush1.bf16.msra.mxu0 0
    %102 = vmatprep.subr.bf16.mxu0 0
    %103 = vmatpush1.bf16.msra.mxu0 0
    %104 = vmatprep.subr.bf16.mxu0 0
    %105 = vmatpush1.bf16.msra.mxu0 0
    %106 = vmatprep.subr.bf16.mxu0 0
    %107 = vmatpush1.bf16.msra.mxu0 0
    %108 = vmatprep.mubr.bf16.mxu0 0
    %109 = vmatmul.mubr.bf16.gmra.mrb[0].mxu0 %v71
    %v110 = vpop.f32.mrb[0].mxu0
    %v111 = vadd.f32 %v33, %v110
    %v112 = vpop.f32.mrb[0].mxu0
    %v113 = vpop.f32.mrb[0].mxu0
    %v114 = vadd.f32 %v33, %v113
    %v115 = vpop.f32.mrb[0].mxu0
    %116 = vmatprep.mubr.bf16.mxu0 0
    %117 = vmatmul.mubr.bf16.gmra.mrb[0].mxu0 %v74
    %v118 = vpop.f32.mrb[0].mxu0
    %v119 = vadd.f32 %v33, %v118
    %v120 = vpop.f32.mrb[0].mxu0
    %v121 = vpop.f32.mrb[0].mxu0
    %v122 = vadd.f32 %v33, %v121
    %v123 = vpop.f32.mrb[0].mxu0
    %124 = vdwg.mxu0
    %vm125 = vcmask 261120
    %126 = vst.msk [vmem:[#allocation2] sm:$0xff] %vm125, %v111
    %127 = vst.msk [vmem:[#allocation2 + $0x8] sm:$0xff] %vm125, %v114
    %128 = vst.msk [vmem:[#allocation2 + $0x10] sm:$0xff] %vm125, %v119
    %129 = vst.msk [vmem:[#allocation2 + $0x18] sm:$0xff] %vm125, %v122
    // Predicated region
    $region14: #{patch_embedding_forward.1} parent=1 // pred_check
      _
    $region15: #{patch_embedding_forward.1} parent=1 // pred_check_branch
      %131 = sbr.rel (0) target = $region17
    $region16: #{patch_embedding_forward.1} parent=1 // pred_region
      %s133 = ssub.s32 512, 512
      %134 = vsyncadd [#allocation3], %s133
      %s135 = sshll.u32 [#allocation2], 4
      %s136 = int_to_ptr.vmem [resolvable:$true] %s135
      %141 = dma.vmem_to_hbm [thread:$0]  %s136, 512, %s3, [#allocation3], 128, 128, 8
    $region17: #{patch_embedding_forward.1} parent=1 // pred_fallthru
      _
    // Predicated region
    $region18: #{patch_embedding_forward.1} parent=1 // pred_check
      _
    $region19: #{patch_embedding_forward.1} parent=1 // pred_check_branch
      %143 = sbr.rel (0) target = $region21
    $region20: #{patch_embedding_forward.1} parent=1 // pred_region
      %144 = dma.done [#allocation3], 512
    $region21: #{patch_embedding_forward.1} parent=1 // pred_fallthru
      _
    %145 = vsyncpa [#allocation3], 1

</llo_original>
